<compile_context>
chip_gen: v6e
topology: v6e:2x2x1
jax: 0.10.0
libtpu: 0.0.40
codegen_flags: <defaults>
</compile_context>

<pallas_src>
import jax
import jax.numpy as jnp
from jax import lax
from jax.experimental import pallas as pl
from jax.experimental.pallas import tpu as pltpu


def _pick_tile(dim, target):
    """Largest divisor of `dim` <= target that is a multiple of 8; else the full dim."""
    if dim <= target:
        return dim
    for t in range(target, 7, -1):
        if dim % t == 0 and t % 8 == 0:
            return t
    return dim  # full dim is always a legal block extent


def luong_attention_kernel(enc_ref, dec_ref, out_ref, acc_ref):
    # enc_ref: (1, tk, H)  dec_ref: (1, tq, H)  out_ref: (1, tq, H)  acc_ref: (tq, H) f32
    k = pl.program_id(2)

    @pl.when(k == 0)
    def _init():
        acc_ref[...] = jnp.zeros_like(acc_ref)

    enc = enc_ref[0]  # (tk, H)
    dec = dec_ref[0]  # (tq, H)

    # scores = dec @ enc^T, contracting on H directly (avoids an XLU transpose of enc).
    scores = lax.dot_general(
        dec, enc,
        dimension_numbers=(((1,), (1,)), ((), ())),
        preferred_element_type=jnp.float32)  # (tq, tk) f32

    # Partial result for this enc tile: scores @ enc, accumulated in f32.
    # Cast scores to the input dtype so both MXU operands run at native rate
    # (no-op for f32 inputs; bf16 inputs keep full bf16 MXU throughput).
    acc_ref[...] += jnp.dot(scores.astype(enc.dtype), enc,
                            preferred_element_type=jnp.float32)

    @pl.when(k == pl.num_programs(2) - 1)
    def _store():
        out_ref[0] = acc_ref[...].astype(out_ref.dtype)


def luong_attention(encoder_hidden_states, decoder_hidden_states,
                    *, q_tile=512, k_tile=512):
    B, S_enc, H = encoder_hidden_states.shape
    Bd, S_dec, Hd = decoder_hidden_states.shape
    assert B == Bd and H == Hd
    out_dtype = decoder_hidden_states.dtype

    # Lane-dense layout: pad H (lane axis) to a multiple of 128. Exact: zero
    # columns don't change dec@enc^T, and the padded output columns are zero.
    H_pad = ((H + 127) // 128) * 128
    if H_pad != H:
        pad = [(0, 0), (0, 0), (0, H_pad - H)]
        enc = jnp.pad(encoder_hidden_states, pad)
        dec = jnp.pad(decoder_hidden_states, pad)
    else:
        enc = encoder_hidden_states
        dec = decoder_hidden_states

    tq = _pick_tile(S_dec, q_tile)
    tk = _pick_tile(S_enc, k_tile)
    grid = (B, S_dec // tq, S_enc // tk)

    flops = 4 * B * S_dec * S_enc * H_pad  # two matmuls
    bytes_accessed = (enc.size * enc.dtype.itemsize
                      + dec.size * dec.dtype.itemsize
                      + B * S_dec * H_pad * jnp.dtype(out_dtype).itemsize)

    out = pl.pallas_call(
        luong_attention_kernel,
        out_shape=jax.ShapeDtypeStruct((B, S_dec, H_pad), out_dtype),
        grid_spec=pltpu.PrefetchScalarGridSpec(
            num_scalar_prefetch=0,
            grid=grid,
            in_specs=[
                # enc streams over the reduction axis k.
                pl.BlockSpec((1, tk, H_pad), lambda b, q, k: (b, k, 0)),
                # dec stays resident across k (block index unchanged -> no re-DMA).
                pl.BlockSpec((1, tq, H_pad), lambda b, q, k: (b, q, 0)),
            ],
            out_specs=pl.BlockSpec((1, tq, H_pad), lambda b, q, k: (b, q, 0)),
            scratch_shapes=[pltpu.VMEM((tq, H_pad), jnp.float32)],
        ),
        compiler_params=pltpu.CompilerParams(
            dimension_semantics=("parallel", "parallel", "arbitrary"),
        ),
        cost_estimate=pl.CostEstimate(
            flops=flops, transcendentals=0, bytes_accessed=bytes_accessed),
    )(enc, dec)

    if H_pad != H:
        out = out[..., :H]
    return out


def luong_attention_ref(enc, dec):
    # Pure-JAX reference mirroring the PyTorch code literally.
    dot_product = jnp.matmul(dec, jnp.transpose(enc, (0, 2, 1)))
    prod_enc = dot_product[..., None] * enc[:, None, :, :]
    return jnp.sum(prod_enc, axis=2)


if __name__ == "__main__":
    B, S_enc, S_dec, H = 2, 8, 8, 32
    key = jax.random.PRNGKey(0)
    k_enc, k_dec = jax.random.split(key)
    enc = jax.random.normal(k_enc, (B, S_enc, H), dtype=jnp.float32)
    dec = jax.random.normal(k_dec, (B, S_dec, H), dtype=jnp.float32)

    out = luong_attention(enc, dec)
    out = jax.block_until_ready(out)

    ref = luong_attention_ref(enc, dec)
    assert out.shape == (B, S_dec, H)
    assert jnp.allclose(out, ref, atol=1e-4, rtol=1e-4)
    print("KERNEL_OK")
</pallas_src>

<mosaic_0001>
module attributes {stable_mosaic.version = 11 : i64} {
  func.func @luong_attention_kernel(%arg0: i32, %arg1: i32, %arg2: i32, %arg3: memref<1x8x128xf32, #tpu.memory_space<vmem>>, %arg4: memref<1x8x128xf32, #tpu.memory_space<vmem>>, %arg5: memref<1x8x128xf32, #tpu.memory_space<vmem>>, %arg6: memref<8x128xf32, #tpu.memory_space<vmem>>) attributes {dimension_semantics = [#tpu.dimension_semantics<parallel>, #tpu.dimension_semantics<parallel>, #tpu.dimension_semantics<arbitrary>], iteration_bounds = array<i64: 2, 1, 1>, scalar_prefetch = 0 : i64, scratch_operands = 1 : i64, tpu.core_type = #tpu.core_type<tc>, window_params = [{transform_indices = @transform_0, window_bounds = array<i64: 1, 8, 128>}, {transform_indices = @transform_1, window_bounds = array<i64: 1, 8, 128>}, {transform_indices = @transform_2, window_bounds = array<i64: 1, 8, 128>}]} {
    %c0_i32 = arith.constant 0 : i32
    %0 = arith.cmpi eq, %arg2, %c0_i32 : i32
    %1 = arith.extui %0 : i1 to i32
    %c0_i32_0 = arith.constant 0 : i32
    %2 = arith.cmpi ne, %1, %c0_i32_0 : i32
    scf.if %2 {
      %cst_13 = arith.constant 0.000000e+00 : f32
      %15 = vector.broadcast %cst_13 : f32 to vector<8x128xf32>
      %c0_14 = arith.constant 0 : index
      %c0_15 = arith.constant 0 : index
      %16 = vector.load %arg6[%c0_14, %c0_15] : memref<8x128xf32, #tpu.memory_space<vmem>>, vector<8x128xf32>
      tpu.vector_store %arg6[%c0_14, %c0_15], %15 {strides = array<i32>} : memref<8x128xf32, #tpu.memory_space<vmem>>, vector<8x128xf32>,
    } else {
    }
    %c0 = arith.constant 0 : index
    %c0_1 = arith.constant 0 : index
    %c0_2 = arith.constant 0 : index
    %3 = vector.load %arg3[%c0, %c0_1, %c0_2] : memref<1x8x128xf32, #tpu.memory_space<vmem>>, vector<1x8x128xf32>
    %4 = vector.shape_cast %3 : vector<1x8x128xf32> to vector<8x128xf32>
    %c0_3 = arith.constant 0 : index
    %c0_4 = arith.constant 0 : index
    %c0_5 = arith.constant 0 : index
    %5 = vector.load %arg4[%c0_3, %c0_4, %c0_5] : memref<1x8x128xf32, #tpu.memory_space<vmem>>, vector<1x8x128xf32>
    %6 = vector.shape_cast %5 : vector<1x8x128xf32> to vector<8x128xf32>
    %cst = arith.constant dense<0.000000e+00> : vector<8x8xf32>
    %7 = tpu.matmul %6, %4, %cst {dimension_numbers = #tpu.dot_dimension_numbers<[1], [1], [0], [0], [0, 0, 1, 0], [], []>} : vector<8x128xf32>, vector<8x128xf32>, vector<8x8xf32> -> vector<8x8xf32>
    %c0_6 = arith.constant 0 : index
    %c0_7 = arith.constant 0 : index
    %8 = vector.load %arg6[%c0_6, %c0_7] : memref<8x128xf32, #tpu.memory_space<vmem>>, vector<8x128xf32>
    %cst_8 = arith.constant dense<0.000000e+00> : vector<8x128xf32>
    %9 = tpu.matmul %7, %4, %cst_8 {dimension_numbers = #tpu.dot_dimension_numbers<[1], [0], [0], [1], [0, 0, 1, 1], [], []>} : vector<8x8xf32>, vector<8x128xf32>, vector<8x128xf32> -> vector<8x128xf32>
    %10 = arith.addf %8, %9 : vector<8x128xf32>
    %c0_9 = arith.constant 0 : index
    %c0_10 = arith.constant 0 : index
    %11 = vector.load %arg6[%c0_9, %c0_10] : memref<8x128xf32, #tpu.memory_space<vmem>>, vector<8x128xf32>
    tpu.vector_store %arg6[%c0_9, %c0_10], %10 {strides = array<i32>} : memref<8x128xf32, #tpu.memory_space<vmem>>, vector<8x128xf32>,
    %c0_i32_11 = arith.constant 0 : i32
    %12 = arith.cmpi eq, %arg2, %c0_i32_11 : i32
    %13 = arith.extui %12 : i1 to i32
    %c0_i32_12 = arith.constant 0 : i32
    %14 = arith.cmpi ne, %13, %c0_i32_12 : i32
    scf.if %14 {
      %c0_13 = arith.constant 0 : index
      %c0_14 = arith.constant 0 : index
      %15 = vector.load %arg6[%c0_13, %c0_14] : memref<8x128xf32, #tpu.memory_space<vmem>>, vector<8x128xf32>
      %c0_15 = arith.constant 0 : index
      %c0_16 = arith.constant 0 : index
      %c0_17 = arith.constant 0 : index
      %16 = vector.load %arg5[%c0_15, %c0_16, %c0_17] : memref<1x8x128xf32, #tpu.memory_space<vmem>>, vector<1x8x128xf32>
      %17 = vector.shape_cast %16 : vector<1x8x128xf32> to vector<8x128xf32>
      %18 = vector.shape_cast %15 : vector<8x128xf32> to vector<1x8x128xf32>
      tpu.vector_store %arg5[%c0_15, %c0_16, %c0_17], %18 {strides = array<i32>} : memref<1x8x128xf32, #tpu.memory_space<vmem>>, vector<1x8x128xf32>,
    } else {
    }
    return
  }
  func.func @transform_0(%arg0: i32, %arg1: i32, %arg2: i32) -> (i32, i32, i32) {
    %c0_i32 = arith.constant 0 : i32
    %c0_i32_0 = arith.constant 0 : i32
    return %arg0, %arg2, %c0_i32 : i32, i32, i32
  }
  func.func @transform_1(%arg0: i32, %arg1: i32, %arg2: i32) -> (i32, i32, i32) {
    %c0_i32 = arith.constant 0 : i32
    %c0_i32_0 = arith.constant 0 : i32
    return %arg0, %arg1, %c0_i32 : i32, i32, i32
  }
  func.func @transform_2(%arg0: i32, %arg1: i32, %arg2: i32) -> (i32, i32, i32) {
    %c0_i32 = arith.constant 0 : i32
    %c0_i32_0 = arith.constant 0 : i32
    return %arg0, %arg1, %c0_i32 : i32, i32, i32
  }
}

</mosaic_0001>

<llo_original>
// kernel: tpu_custom_call.1
$region0: #{tpu_custom_call.1}
  #allocation0 [shape = 'u32[]', space=smem, size = 0x4, offset = 0x4, fixed_abs, tag = 'smem constant byte address 0x4 - core index']
  #allocation1 [shape = 'u32[144,128]{1,0:T(1,128)}', space=vmem, size = 0x12000, scoped, tag = 'internal scratch']
  #allocation2 [shape = 'f32[8,128]{1,0:T(8,128)}', space=vmem, size = 0x1000, scoped, tag = 'scratch operand']
  %s0 = inlined_call_operand.hbm [shape: f32[2,8,128], index: 0, kind: input, shape index: {}]
  %s1 = inlined_call_operand.hbm [shape: f32[2,8,128], index: 1, kind: input, shape index: {}]
  %s2 = inlined_call_operand.hbm [shape: f32[2,8,128], index: 2, kind: output, shape index: {}]
  %s3 = sld [smem:[#allocation0]]
  $region57: #{tpu_custom_call.1} parent=0
    _
  %s5 = ssub.s32 1, %s3
  %s6 = scalar_select 0, %s5, %s3
  $region1: #{tpu_custom_call.1} parent=0
    #allocation3 [shape = 'u8[8192]{0}', space=vmem, size = 0x2000, scoped, tag = 'input window, operand 0']
    #allocation4 [shape = 's32[2]{0}', space=sflag, size = 0x8, scoped, tag = 'scoped memory for tpu_custom_call.1']
    #allocation5 [shape = 's32[2]{0}', space=sflag, size = 0x8, scoped, tag = 'scoped memory for tpu_custom_call.1']
    #allocation6 [shape = 'u8[8192]{0}', space=vmem, size = 0x2000, scoped, tag = 'input window, operand 1']
    #allocation7 [shape = 's32[2]{0}', space=sflag, size = 0x8, scoped, tag = 'scoped memory for tpu_custom_call.1']
    #allocation8 [shape = 'u8[8192]{0}', space=vmem, size = 0x2000, scoped, tag = 'output window, operand 0']
    %7 = vsyncpa [#allocation4], 0
    %s8 = scalar_lea.sflag [#allocation4], 1
    %9 = vsyncpa %s8, 0
    %10 = vsyncpa [#allocation7], 0
    %s11 = scalar_lea.sflag [#allocation7], 1
    %12 = vsyncpa %s11, 0
    %13 = vsyncpa [#allocation5], 0
    %s14 = scalar_lea.sflag [#allocation5], 1
    %15 = vsyncpa %s14, 0
    loop: start=0, step=1, limit=4
    $region2: #{tpu_custom_call.1} parent=1 // loop_pre_header
      _
    $region3: #{tpu_custom_call.1} parent=1 // loop_header
      %s17 = sphi 0, %s21
      %p18 = scmp.ge.s32.totalorder %s17, 4
      %s24 = sphi 0, %s43
      %s25 = sphi 0, %s39
      %s26 = sphi 0, %s35
      %s27 = sphi 0, %s24
      %s28 = sphi 0, %s25
      %s29 = sphi 0, %s26
      %s30 = sphi 0, %s27
      %s31 = sphi 0, %s28
      %s32 = sphi 0, %s29
      %s48 = sphi 0, %s50
      %s51 = sphi 0, %s48
      %s52 = sphi 0, %s51
      %s68 = sphi 0, %s52
      %s76 = sphi 0, %s78
      %s79 = sphi 0, %s76
      %s80 = sphi 0, %s79
      %s96 = sphi 0, %s80
      %s104 = sphi 0, %s106
      %s107 = sphi 0, %s104
      %s108 = sphi 0, %s107
      %s124 = sphi 0, %s108
    $region4: #{tpu_custom_call.1} parent=1 // loop_header_branch
      %20 = sbr.rel (%p18) target = $region8
    $region5: #{tpu_custom_call.1} parent=1 // loop_body
      %s22 = ssub.s32 %s17, 1
      %s23 = ssub.s32 %s17, 2
      %s33 = sadd.s32 1, %s26
      %p34 = scmp.ge.s32.totalorder %s33, 1
      %s35 = scalar_select %p34, 0, %s33
      %s36 = sadd.s32 1, %s25
      %s37 = scalar_select %p34, %s36, %s25
      %p38 = scmp.ge.s32.totalorder %s37, 1
      %s39 = scalar_select %p38, 0, %s37
      %s40 = sadd.s32 1, %s24
      %s41 = scalar_select %p38, %s40, %s24
      %p42 = scmp.ge.s32.totalorder %s41, 2
      %s43 = scalar_select %p42, 0, %s41
      %s44 = ssub.s32 %s24, %s43
      %s45 = ssub.s32 %s26, %s35
      %s46 = sor.u32 %s44, %s45
      %p47 = scmp.eq.s32.totalorder %s46, 0
      %s49 = sadd.s32 %s48, 1
      %s50 = scalar_select %p47, %s48, %s49
      %p53 = pneg %p47
      %p54 = scmp.eq.s32.totalorder %s17, 1
      %p55 = por %p53, %p54
      %p56 = scmp.ne.s32.totalorder %s48, %s51
      %p57 = scmp.eq.s32.totalorder %s17, 0
      %p58 = por %p56, %p57
      %p59 = scmp.ne.s32.totalorder %s48, %s51
      %p60 = scmp.eq.s32.totalorder %s22, 1
      %p61 = por %p59, %p60
      %p62 = scmp.ne.s32.totalorder %s51, %s52
      %p63 = scmp.eq.s32.totalorder %s22, 0
      %p64 = por %p62, %p63
      %p65 = scmp.ne.s32.totalorder %s51, %s52
      %p66 = scmp.eq.s32.totalorder %s23, 1
      %p67 = por %p65, %p66
      %p69 = scmp.ne.s32.totalorder %s52, %s68
      %p70 = scmp.eq.s32.totalorder %s23, 0
      %p71 = por %p69, %p70
      %s72 = ssub.s32 %s24, %s43
      %s73 = ssub.s32 %s25, %s39
      %s74 = sor.u32 %s72, %s73
      %p75 = scmp.eq.s32.totalorder %s74, 0
      %s77 = sadd.s32 %s76, 1
      %s78 = scalar_select %p75, %s76, %s77
      %p81 = pneg %p75
      %p82 = scmp.eq.s32.totalorder %s17, 1
      %p83 = por %p81, %p82
      %p84 = scmp.ne.s32.totalorder %s76, %s79
      %p85 = scmp.eq.s32.totalorder %s17, 0
      %p86 = por %p84, %p85
      %p87 = scmp.ne.s32.totalorder %s76, %s79
      %p88 = scmp.eq.s32.totalorder %s22, 1
      %p89 = por %p87, %p88
      %p90 = scmp.ne.s32.totalorder %s79, %s80
      %p91 = scmp.eq.s32.totalorder %s22, 0
      %p92 = por %p90, %p91
      %p93 = scmp.ne.s32.totalorder %s79, %s80
      %p94 = scmp.eq.s32.totalorder %s23, 1
      %p95 = por %p93, %p94
      %p97 = scmp.ne.s32.totalorder %s80, %s96
      %p98 = scmp.eq.s32.totalorder %s23, 0
      %p99 = por %p97, %p98
      %s100 = ssub.s32 %s24, %s43
      %s101 = ssub.s32 %s25, %s39
      %s102 = sor.u32 %s100, %s101
      %p103 = scmp.eq.s32.totalorder %s102, 0
      %s105 = sadd.s32 %s104, 1
      %s106 = scalar_select %p103, %s104, %s105
      %p109 = pneg %p103
      %p110 = scmp.eq.s32.totalorder %s17, 1
      %p111 = por %p109, %p110
      %p112 = scmp.ne.s32.totalorder %s104, %s107
      %p113 = scmp.eq.s32.totalorder %s17, 0
      %p114 = por %p112, %p113
      %p115 = scmp.ne.s32.totalorder %s104, %s107
      %p116 = scmp.eq.s32.totalorder %s22, 1
      %p117 = por %p115, %p116
      %p118 = scmp.ne.s32.totalorder %s107, %s108
      %p119 = scmp.eq.s32.totalorder %s22, 0
      %p120 = por %p118, %p119
      %p121 = scmp.ne.s32.totalorder %s107, %s108
      %p122 = scmp.eq.s32.totalorder %s23, 1
      %p123 = por %p121, %p122
      %p125 = scmp.ne.s32.totalorder %s108, %s124
      %p126 = scmp.eq.s32.totalorder %s23, 0
      %p127 = por %p125, %p126
      %p128 = scmp.le.s32.totalorder 1, %s17
      %p129 = scmp.lt.s32.totalorder %s17, 3
      %p130 = pnand %p128, %p129
      %p131 = pneg %p130
      // Predicated region
      $region9: #{tpu_custom_call.1} parent=5 // pred_check
        _
      $region10: #{tpu_custom_call.1} parent=5 // pred_check_branch
        %133 = sbr.rel (%p130) target = $region12
      $region11: #{tpu_custom_call.1} parent=5 // pred_region
        %s134 = ssub.s32 %s17, 1
      $region12: #{tpu_custom_call.1} parent=5 // pred_fallthru
        _
      %p135 = scmp.lt.s32.totalorder %s17, 2
      // Predicated region
      $region13: #{tpu_custom_call.1} parent=5 // pred_check
        %p136 = pneg %p135
      $region14: #{tpu_custom_call.1} parent=5 // pred_check_branch
        %138 = sbr.rel (%p136) target = $region16
      $region15: #{tpu_custom_call.1} parent=5 // pred_region
        // Predicated region
        $region17: #{tpu_custom_call.1} parent=15 // pred_check
          %p139 = pneg %p58
        $region18: #{tpu_custom_call.1} parent=15 // pred_check_branch
          %141 = sbr.rel (%p139) target = $region20
        $region19: #{tpu_custom_call.1} parent=15 // pred_region
          %s142 = sand.u32 %s48, 1
          %s143 = scalar_lea.sflag [#allocation4], %s142
          %s144 = sand.u32 %s48, 1
          %s145 = smul.addr %s144, 8
          %s146 = scalar_lea.vmem [#allocation3], %s145
          %s148 = ssub.s32 128, 128
          %149 = vsyncadd %s143, %s148
          %s150 = sadd.s32 %s26, %s24
          %s151 = smul.addr %s150, 128
          %s152 = scalar_lea.hbm %s0, %s151
          %s154 = sshll.u32 %s146, 4
          %s155 = int_to_ptr.vmem [resolvable:$true] %s154
          %157 = dma.hbm_to_vmem [thread:$0]  %s152, 128, %s155, %s143
        $region20: #{tpu_custom_call.1} parent=15 // pred_fallthru
          _
        // Predicated region
        $region21: #{tpu_custom_call.1} parent=15 // pred_check
          %p158 = pneg %p86
        $region22: #{tpu_custom_call.1} parent=15 // pred_check_branch
          %160 = sbr.rel (%p158) target = $region24
        $region23: #{tpu_custom_call.1} parent=15 // pred_region
          %s161 = sand.u32 %s76, 1
          %s162 = scalar_lea.sflag [#allocation7], %s161
          %s163 = sand.u32 %s76, 1
          %s164 = smul.addr %s163, 8
          %s165 = scalar_lea.vmem [#allocation6], %s164
          %s167 = ssub.s32 128, 128
          %168 = vsyncadd %s162, %s167
          %s169 = sadd.s32 %s25, %s24
          %s170 = smul.addr %s169, 128
          %s171 = scalar_lea.hbm %s1, %s170
          %s173 = sshll.u32 %s165, 4
          %s174 = int_to_ptr.vmem [resolvable:$true] %s173
          %176 = dma.hbm_to_vmem [thread:$0]  %s171, 128, %s174, %s162
        $region24: #{tpu_custom_call.1} parent=15 // pred_fallthru
          _
      $region16: #{tpu_custom_call.1} parent=5 // pred_fallthru
        _
      %p177 = scmp.le.s32.totalorder 1, %s17
      %p178 = scmp.lt.s32.totalorder %s17, 3
      %p179 = pnand %p177, %p178
      %p180 = pneg %p179
      // Predicated region
      $region25: #{tpu_custom_call.1} parent=5 // pred_check
        _
      $region26: #{tpu_custom_call.1} parent=5 // pred_check_branch
        %182 = sbr.rel (%p179) target = $region28
      $region27: #{tpu_custom_call.1} parent=5 // pred_region
        %s183 = ssub.s32 %s17, 1
        %s184 = sand.u32 %s51, 1
        %s185 = scalar_lea.sflag [#allocation4], %s184
        %s186 = sand.u32 %s51, 1
        %s187 = smul.addr %s186, 8
        %s188 = scalar_lea.vmem [#allocation3], %s187
        // Predicated region
        $region29: #{tpu_custom_call.1} parent=27 // pred_check
          %p189 = pneg %p64
        $region30: #{tpu_custom_call.1} parent=27 // pred_check_branch
          %191 = sbr.rel (%p189) target = $region32
        $region31: #{tpu_custom_call.1} parent=27 // pred_region
          %192 = dma.done %s185, 128
        $region32: #{tpu_custom_call.1} parent=27 // pred_fallthru
          _
        %s193 = sand.u32 %s79, 1
        %s194 = scalar_lea.sflag [#allocation7], %s193
        %s195 = sand.u32 %s79, 1
        %s196 = smul.addr %s195, 8
        %s197 = scalar_lea.vmem [#allocation6], %s196
        // Predicated region
        $region33: #{tpu_custom_call.1} parent=27 // pred_check
          %p198 = pneg %p92
        $region34: #{tpu_custom_call.1} parent=27 // pred_check_branch
          %200 = sbr.rel (%p198) target = $region36
        $region35: #{tpu_custom_call.1} parent=27 // pred_region
          %201 = dma.done %s194, 128
        $region36: #{tpu_custom_call.1} parent=27 // pred_fallthru
          _
        %s202 = sand.u32 %s51, 1
        %s203 = scalar_lea.sflag [#allocation4], %s202
        %s204 = sand.u32 %s51, 1
        %s205 = smul.addr %s204, 8
        %s206 = scalar_lea.vmem [#allocation3], %s205
        %p207 = pneg %p64
        %p208 = pneg %p61
        %s209 = sand.u32 %s79, 1
        %s210 = scalar_lea.sflag [#allocation7], %s209
        %s211 = sand.u32 %s79, 1
        %s212 = smul.addr %s211, 8
        %s213 = scalar_lea.vmem [#allocation6], %s212
        %p214 = pneg %p92
        %p215 = pneg %p89
        %p216 = pneg %p120
        %p217 = pneg %p117
        %s218 = sand.u32 %s107, 1
        %s219 = scalar_lea.sflag [#allocation5], %s218
        %s220 = sand.u32 %s107, 1
        %s221 = smul.addr %s220, 8
        %s222 = scalar_lea.vmem [#allocation8], %s221
        %p223 = scmp.eq.s32.totalorder %s29, 0
        // Predicated region
        $region37: #{tpu_custom_call.1} parent=27 // pred_check
          %p224 = pneg %p223
        $region38: #{tpu_custom_call.1} parent=27 // pred_check_branch
          %226 = sbr.rel (%p224) target = $region40
        $region39: #{tpu_custom_call.1} parent=27 // pred_region
          %227 = vst [vmem:[#allocation2] sm:$0xff] 0.0
        $region40: #{tpu_custom_call.1} parent=27 // pred_fallthru
          _
        %v228 = vld [vmem:[%s188] sm:$0xff]
        %v229 = vld [vmem:[%s197] sm:$0xff]
        %230 = vmatprep.subr.mxu0 0.0
        %231 = vmatpush1.xpose.msra.mxu0 0.0
        %232 = vmatprep.subr.mxu0 0.0
        %233 = vmatpush1.xpose.msra.mxu0 0.0
        %234 = vmatprep.subr.mxu0 0.0
        %235 = vmatpush1.xpose.msra.mxu0 0.0
        %236 = vmatprep.subr.mxu0 0.0
        %237 = vmatpush1.xpose.msra.mxu0 0.0
        %238 = vmatprep.subr.mxu0 0.0
        %239 = vmatpush1.xpose.msra.mxu0 0.0
        %240 = vmatprep.subr.mxu0 0.0
        %241 = vmatpush1.xpose.msra.mxu0 0.0
        %242 = vmatprep.subr.mxu0 0.0
        %243 = vmatpush1.xpose.msra.mxu0 0.0
        %244 = vmatprep.subr.mxu0 0.0
        %245 = vmatpush1.xpose.msra.mxu0 0.0
        %246 = vmatprep.subr.mxu0 0.0
        %247 = vmatpush1.xpose.msra.mxu0 0.0
        %248 = vmatprep.subr.mxu0 0.0
        %249 = vmatpush1.xpose.msra.mxu0 0.0
        %250 = vmatprep.subr.mxu0 0.0
        %251 = vmatpush1.xpose.msra.mxu0 0.0
        %252 = vmatprep.subr.mxu0 0.0
        %253 = vmatpush1.xpose.msra.mxu0 0.0
        %254 = vmatprep.subr.mxu0 0.0
        %255 = vmatpush1.xpose.msra.mxu0 0.0
        %256 = vmatprep.subr.mxu0 0.0
        %257 = vmatpush1.xpose.msra.mxu0 0.0
        %258 = vmatprep.subr.mxu0 0.0
        %259 = vmatpush1.xpose.msra.mxu0 0.0
        %260 = vmatprep.subr.mxu0 0.0
        %261 = vmatpush1.xpose.msra.mxu0 %v228
        %262 = vmatprep.subr.mxu0 0.0
        %263 = vmatpush2.xpose.msra.mxu0 0.0
        %264 = vmatprep.subr.mxu0 0.0
        %265 = vmatpush2.xpose.msra.mxu0 0.0
        %266 = vmatprep.subr.mxu0 0.0
        %267 = vmatpush2.xpose.msra.mxu0 0.0
        %268 = vmatprep.subr.mxu0 0.0
        %269 = vmatpush2.xpose.msra.mxu0 0.0
        %270 = vmatprep.subr.mxu0 0.0
        %271 = vmatpush2.xpose.msra.mxu0 0.0
        %272 = vmatprep.subr.mxu0 0.0
        %273 = vmatpush2.xpose.msra.mxu0 0.0
        %274 = vmatprep.subr.mxu0 0.0
        %275 = vmatpush2.xpose.msra.mxu0 0.0
        %276 = vmatprep.subr.mxu0 0.0
        %277 = vmatpush2.xpose.msra.mxu0 0.0
        %278 = vmatprep.subr.mxu0 0.0
        %279 = vmatpush2.xpose.msra.mxu0 0.0
        %280 = vmatprep.subr.mxu0 0.0
        %281 = vmatpush2.xpose.msra.mxu0 0.0
        %282 = vmatprep.subr.mxu0 0.0
        %283 = vmatpush2.xpose.msra.mxu0 0.0
        %284 = vmatprep.subr.mxu0 0.0
        %285 = vmatpush2.xpose.msra.mxu0 0.0
        %286 = vmatprep.subr.mxu0 0.0
        %287 = vmatpush2.xpose.msra.mxu0 0.0
        %288 = vmatprep.subr.mxu0 0.0
        %289 = vmatpush2.xpose.msra.mxu0 0.0
        %290 = vmatprep.subr.mxu0 0.0
        %291 = vmatpush2.xpose.msra.mxu0 0.0
        %292 = vmatprep.subr.mxu0 0.0
        %293 = vmatpush2.xpose.msra.mxu0 0.0
        %294 = vmatprep.mubr.f32.mxu0 0.0
        %295 = vmatmul.mubr.f32.gmra.mxu0 %v229
        %v296 = vpop.f32.mrf.mxu0
        %v297 = vadd.f32 0.0, %v296
        %v298 = vpop.f32.mrf.mxu0
        %299 = vdwg.mxu0
        %v300 = vld [vmem:[#allocation2] sm:$0xff]
        %vm301 = vcmask 64512
        %v303 = vsel %vm301, %v297, 0
        %305 = vmatprep.subr.mxu0 0.0
        %306 = vmatpush1.msra.mxu0 0.0
        %307 = vmatprep.subr.mxu0 0.0
        %308 = vmatpush1.msra.mxu0 0.0
        %309 = vmatprep.subr.mxu0 0.0
        %310 = vmatpush1.msra.mxu0 0.0
        %311 = vmatprep.subr.mxu0 0.0
        %312 = vmatpush1.msra.mxu0 0.0
        %313 = vmatprep.subr.mxu0 0.0
        %314 = vmatpush1.msra.mxu0 0.0
        %315 = vmatprep.subr.mxu0 0.0
        %316 = vmatpush1.msra.mxu0 0.0
        %317 = vmatprep.subr.mxu0 0.0
        %318 = vmatpush1.msra.mxu0 0.0
        %319 = vmatprep.subr.mxu0 0.0
        %320 = vmatpush1.msra.mxu0 0.0
        %321 = vmatprep.subr.mxu0 0.0
        %322 = vmatpush1.msra.mxu0 0.0
        %323 = vmatprep.subr.mxu0 0.0
        %324 = vmatpush1.msra.mxu0 0.0
        %325 = vmatprep.subr.mxu0 0.0
        %326 = vmatpush1.msra.mxu0 0.0
        %327 = vmatprep.subr.mxu0 0.0
        %328 = vmatpush1.msra.mxu0 0.0
        %329 = vmatprep.subr.mxu0 0.0
        %330 = vmatpush1.msra.mxu0 0.0
        %331 = vmatprep.subr.mxu0 0.0
        %332 = vmatpush1.msra.mxu0 0.0
        %333 = vmatprep.subr.mxu0 0.0
        %334 = vmatpush1.msra.mxu0 0.0
        %335 = vmatprep.subr.mxu0 0.0
        %336 = vmatpush1.msra.mxu0 %v228
        %337 = vmatprep.subr.mxu0 0.0
        %338 = vmatpush2.msra.mxu0 0.0
        %339 = vmatprep.subr.mxu0 0.0
        %340 = vmatpush2.msra.mxu0 0.0
        %341 = vmatprep.subr.mxu0 0.0
        %342 = vmatpush2.msra.mxu0 0.0
        %343 = vmatprep.subr.mxu0 0.0
        %344 = vmatpush2.msra.mxu0 0.0
        %345 = vmatprep.subr.mxu0 0.0
        %346 = vmatpush2.msra.mxu0 0.0
        %347 = vmatprep.subr.mxu0 0.0
        %348 = vmatpush2.msra.mxu0 0.0
        %349 = vmatprep.subr.mxu0 0.0
        %350 = vmatpush2.msra.mxu0 0.0
        %351 = vmatprep.subr.mxu0 0.0
        %352 = vmatpush2.msra.mxu0 0.0
        %353 = vmatprep.subr.mxu0 0.0
        %354 = vmatpush2.msra.mxu0 0.0
        %355 = vmatprep.subr.mxu0 0.0
        %356 = vmatpush2.msra.mxu0 0.0
        %357 = vmatprep.subr.mxu0 0.0
        %358 = vmatpush2.msra.mxu0 0.0
        %359 = vmatprep.subr.mxu0 0.0
        %360 = vmatpush2.msra.mxu0 0.0
        %361 = vmatprep.subr.mxu0 0.0
        %362 = vmatpush2.msra.mxu0 0.0
        %363 = vmatprep.subr.mxu0 0.0
        %364 = vmatpush2.msra.mxu0 0.0
        %365 = vmatprep.subr.mxu0 0.0
        %366 = vmatpush2.msra.mxu0 0.0
        %367 = vmatprep.subr.mxu0 0.0
        %368 = vmatpush2.msra.mxu0 0.0
        %369 = vmatprep.mubr.f32.mxu0 0.0
        %370 = vmatmul.mubr.f32.gmra.mxu0 %v303
        %v371 = vpop.f32.mrf.mxu0
        %v372 = vadd.f32 0.0, %v371
        %v373 = vpop.f32.mrf.mxu0
        %374 = vdwg.mxu0
        %v375 = vadd.f32 %v300, %v372
        %376 = vst [vmem:[#allocation2] sm:$0xff] %v375
        // Predicated region
        $region41: #{tpu_custom_call.1} parent=27 // pred_check
          %p377 = pneg %p223
        $region42: #{tpu_custom_call.1} parent=27 // pred_check_branch
          %379 = sbr.rel (%p377) target = $region44
        $region43: #{tpu_custom_call.1} parent=27 // pred_region
          %v380 = vld [vmem:[#allocation2] sm:$0xff]
          %381 = vst [vmem:[%s222] sm:$0xff] %v380
        $region44: #{tpu_custom_call.1} parent=27 // pred_fallthru
          _
        %s382 = sand.u32 %s107, 1
        %s383 = scalar_lea.sflag [#allocation5], %s382
        %s384 = sand.u32 %s107, 1
        %s385 = smul.addr %s384, 8
        %s386 = scalar_lea.vmem [#allocation8], %s385
        // Predicated region
        $region45: #{tpu_custom_call.1} parent=27 // pred_check
          %p387 = pneg %p117
        $region46: #{tpu_custom_call.1} parent=27 // pred_check_branch
          %389 = sbr.rel (%p387) target = $region48
        $region47: #{tpu_custom_call.1} parent=27 // pred_region
          %s391 = ssub.s32 128, 128
          %392 = vsyncadd %s383, %s391
          %s393 = sadd.s32 %s28, %s27
          %s394 = smul.addr %s393, 128
          %s395 = scalar_lea.hbm %s2, %s394
          %s397 = sshll.u32 %s386, 4
          %s398 = int_to_ptr.vmem [resolvable:$true] %s397
          %400 = dma.vmem_to_hbm [thread:$0]  %s398, 128, %s395, %s383
        $region48: #{tpu_custom_call.1} parent=27 // pred_fallthru
          _
      $region28: #{tpu_custom_call.1} parent=5 // pred_fallthru
        _
      %p401 = scmp.le.s32.totalorder 2, %s17
      // Predicated region
      $region49: #{tpu_custom_call.1} parent=5 // pred_check
        %p402 = pneg %p401
      $region50: #{tpu_custom_call.1} parent=5 // pred_check_branch
        %404 = sbr.rel (%p402) target = $region52
      $region51: #{tpu_custom_call.1} parent=5 // pred_region
        %s405 = ssub.s32 %s17, 2
        // Predicated region
        $region53: #{tpu_custom_call.1} parent=51 // pred_check
          %p406 = pneg %p123
        $region54: #{tpu_custom_call.1} parent=51 // pred_check_branch
          %408 = sbr.rel (%p406) target = $region56
        $region55: #{tpu_custom_call.1} parent=51 // pred_region
          %s409 = sand.u32 %s108, 1
          %s410 = scalar_lea.sflag [#allocation5], %s409
          %s411 = sand.u32 %s108, 1
          %s412 = smul.addr %s411, 8
          %s413 = scalar_lea.vmem [#allocation8], %s412
          %414 = dma.done %s410, 128
        $region56: #{tpu_custom_call.1} parent=51 // pred_fallthru
          _
      $region52: #{tpu_custom_call.1} parent=5 // pred_fallthru
        _
    $region6: #{tpu_custom_call.1} parent=1 // loop_footer
      %s21 = sadd.s32 1, %s17
    $region7: #{tpu_custom_call.1} parent=1 // loop_footer_branch
      %16 = sbr.rel target = $region3
    $region8: #{tpu_custom_call.1} parent=1 // loop_exit
      _
    %415 = vsyncpa [#allocation4], 1
    %s416 = scalar_lea.sflag [#allocation4], 1
    %417 = vsyncpa %s416, 1
    %418 = vsyncpa [#allocation7], 1
    %s419 = scalar_lea.sflag [#allocation7], 1
    %420 = vsyncpa %s419, 1
    %421 = vsyncpa [#allocation5], 1
    %s422 = scalar_lea.sflag [#allocation5], 1
    %423 = vsyncpa %s422, 1

</llo_original>
